<compile_context>
chip_gen: v6e
topology: v6e:2x2x1
jax: 0.10.0
libtpu: 0.0.40
codegen_flags: <defaults>
</compile_context>

<pallas_src>
import functools

import numpy as np
import jax
import jax.numpy as jnp
from jax.experimental import pallas as pl
from jax.experimental.pallas import tpu as pltpu


def _ceil_div(a, b):
    return -(-a // b)


def _round_up(a, m):
    return _ceil_div(a, m) * m


def gaussian_weights_1d(kernel_size, sigma):
    """Normalized 1-D Gaussian taps.

    The module's 2-D kernel is the normalized outer product of two 1-D
    Gaussians; normalizing the product equals the product of individually
    normalized 1-D kernels, so a separable two-pass filter is exact.
    """
    k = np.arange(kernel_size, dtype=np.float64)
    mean = (kernel_size - 1) / 2.0
    g = np.exp(-(((k - mean) / float(sigma)) ** 2) / 2.0)
    g = g / g.sum()
    taps = tuple(float(v) for v in g)
    return taps, taps  # vertical, horizontal (identical for scalar k/sigma)


def _vmem_capacity_bytes():
    try:
        info = pltpu.get_tpu_info()
        cap = getattr(info, "vmem_capacity_bytes", None)
        if cap:
            return int(cap)
    except Exception:
        pass
    return 128 * 1024 * 1024  # conservative default (v5e/v6e)


def _smooth_kernel(x_ref, o_ref, xp_ref, *, H, W, pad, wv, wh):
    # x_ref : (TN, H, W)            input block (channels leading, W on lanes)
    # o_ref : (TN, H, W)            output block
    # xp_ref: (TN, H+2p, W+2p) f32  scratch with zero halo of width `pad`
    K = len(wv)
    TN, Hs, Ws = xp_ref.shape

    # Re-zero only the thin halo strips each step (the interior is rewritten
    # below).  Re-zeroing every step keeps this correct when the "parallel"
    # grid axis is sharded across TensorCores (each core has its own scratch).
    if pad > 0:
        zrow = jnp.zeros((TN, pad, Ws), jnp.float32)
        xp_ref[:, 0:pad, :] = zrow
        xp_ref[:, pad + H:Hs, :] = zrow
        zcol = jnp.zeros((TN, Hs, pad), jnp.float32)
        xp_ref[:, :, 0:pad] = zcol
        xp_ref[:, :, pad + W:Ws] = zcol

    # Single load + f32 cast of the block; one store into the scratch interior.
    xp_ref[:, pad:pad + H, pad:pad + W] = x_ref[...].astype(jnp.float32)

    # Vertical 1-D pass (sublane-offset reads of the scratch):
    #   tv[n, h, w] = sum_i wv[i] * xp[n, h + i, w]        (only H output rows)
    tv = wv[0] * xp_ref[:, 0:H, :]
    for i in range(1, K):
        tv = tv + wv[i] * xp_ref[:, i:i + H, :]

    # Horizontal 1-D pass (lane-offset slices of the intermediate value):
    #   out[n, h, w] = sum_j wh[j] * tv[n, h, w + j]
    acc = wh[0] * tv[:, :, 0:W]
    for j in range(1, K):
        acc = acc + wh[j] * tv[:, :, j:j + W]

    o_ref[...] = acc.astype(o_ref.dtype)


def gaussian_smoothing_2d(x, kernel_size, sigma):
    """Depthwise Gaussian smoothing.  x: [B, C, H, W] -> [B, C, H, W]."""
    B, C, H, W = x.shape
    K = int(kernel_size)
    # PyTorch Conv2d with even k and padding=k//2 would change the spatial
    # size; restrict to the odd-kernel ("same") case.
    assert K % 2 == 1, "kernel_size must be odd (padding=k//2 'same' output)"
    pad = K // 2
    wv, wh = gaussian_weights_1d(K, sigma)

    BC = B * C
    xr = x.reshape(BC, H, W)  # free: merges contiguous leading dims, no HBM pass
    itemsize = jnp.dtype(x.dtype).itemsize
    Hs, Ws = H + 2 * pad, W + 2 * pad

    # ---- generation-aware VMEM budget -> channels per grid step (TN) ----
    vmem_cap = _vmem_capacity_bytes()
    budget = min((vmem_cap * 2) // 5, 48 * 1024 * 1024)   # <=40% VMEM, <=48 MiB

    def _tiled(r, c, bytes_per):  # (8,128)-tile-padded VMEM footprint
        return _round_up(r, 8) * _round_up(c, 128) * bytes_per

    per_chan = (2 * 2 * _tiled(H, W, itemsize)   # in + out blocks, double-buffered
                + _tiled(Hs, Ws, 4)              # zero-haloed f32 scratch
                + _tiled(H, Ws, 4)               # vertical-pass intermediate (tv)
                + _tiled(H, W, 4))               # accumulator
    tn_budget = max(1, budget // per_chan)
    tn_target = max(1, (6 << 20) // max(1, H * W * itemsize))  # ~6 MiB input/step
    TN = max(1, min(BC, tn_budget, tn_target))
    # v7x megacore: keep >=2 "parallel" grid steps whenever there is >1 channel.
    if BC > 1 and _ceil_div(BC, TN) < 2:
        TN = _ceil_div(BC, 2)
    grid = (_ceil_div(BC, TN),)

    cp_kwargs = dict(dimension_semantics=("parallel",))
    est = TN * per_chan + (1 << 20)
    if est > 12 * 1024 * 1024:
        # 45% of physical VMEM: ~28 MiB on v7x, ~57 MiB on v5e/v6e.
        cp_kwargs["vmem_limit_bytes"] = int(min(est + (4 << 20),
                                                (vmem_cap * 9) // 20))

    kernel = functools.partial(_smooth_kernel, H=H, W=W, pad=pad, wv=wv, wh=wh)

    out = pl.pallas_call(
        kernel,
        out_shape=jax.ShapeDtypeStruct((BC, H, W), x.dtype),
        grid=grid,
        in_specs=[pl.BlockSpec((TN, H, W), lambda c: (c, 0, 0))],
        out_specs=pl.BlockSpec((TN, H, W), lambda c: (c, 0, 0)),
        scratch_shapes=[pltpu.VMEM((TN, Hs, Ws), jnp.float32)],
        compiler_params=pltpu.CompilerParams(**cp_kwargs),
    )(xr)

    return out.reshape(B, C, H, W)  # free reshape: split leading dim


def _reference(x, kernel_size, sigma):
    """Pure-JAX reference: exact f32 depthwise 'same' convolution (shift-add)."""
    wv, wh = gaussian_weights_1d(kernel_size, sigma)
    w2d = np.outer(np.array(wv), np.array(wh))
    K = int(kernel_size)
    pad = K // 2
    B, C, H, W = x.shape
    xp = jnp.pad(x.astype(jnp.float32),
                 ((0, 0), (0, 0), (pad, pad), (pad, pad)))
    out = jnp.zeros((B, C, H, W), jnp.float32)
    for i in range(K):
        for j in range(K):
            out = out + float(w2d[i, j]) * xp[:, :, i:i + H, j:j + W]
    return out.astype(x.dtype)


if __name__ == "__main__":
    B, C, H, W = 2, 4, 16, 16
    kernel_size, sigma = 3, 2.0

    key = jax.random.PRNGKey(0)
    x = jax.random.normal(key, (B, C, H, W), dtype=jnp.float32)

    smooth = jax.jit(functools.partial(gaussian_smoothing_2d,
                                       kernel_size=kernel_size, sigma=sigma))
    y = smooth(x)
    jax.block_until_ready(y)

    y_ref = _reference(x, kernel_size, sigma)
    assert y.shape == (B, C, H, W)
    assert jnp.allclose(y, y_ref, atol=1e-5, rtol=1e-5), float(
        jnp.max(jnp.abs(y - y_ref)))

    print("KERNEL_OK")
</pallas_src>

<mosaic_0001>
module attributes {stable_mosaic.version = 11 : i64} {
  func.func @_smooth_kernel(%arg0: i32, %arg1: memref<4x16x16xf32, #tpu.memory_space<vmem>>, %arg2: memref<4x16x16xf32, #tpu.memory_space<vmem>>, %arg3: memref<4x18x18xf32, #tpu.memory_space<vmem>>) attributes {dimension_semantics = [#tpu.dimension_semantics<parallel>], iteration_bounds = array<i64: 2>, scalar_prefetch = 0 : i64, scratch_operands = 1 : i64, tpu.core_type = #tpu.core_type<tc>, window_params = [{transform_indices = @transform_0, window_bounds = array<i64: 4, 16, 16>}, {transform_indices = @transform_1, window_bounds = array<i64: 4, 16, 16>}]} {
    %cst = arith.constant 0.000000e+00 : f32
    %0 = vector.broadcast %cst : f32 to vector<4x1x18xf32>
    %c0 = arith.constant 0 : index
    %c0_0 = arith.constant 0 : index
    %c0_1 = arith.constant 0 : index
    %1 = vector.load %arg3[%c0, %c0_0, %c0_1] : memref<4x18x18xf32, #tpu.memory_space<vmem>>, vector<4x1x18xf32>
    tpu.vector_store %arg3[%c0, %c0_0, %c0_1], %0 {strides = array<i32>} : memref<4x18x18xf32, #tpu.memory_space<vmem>>, vector<4x1x18xf32>,
    %c0_2 = arith.constant 0 : index
    %c17 = arith.constant 17 : index
    %c0_3 = arith.constant 0 : index
    %2 = vector.load %arg3[%c0_2, %c17, %c0_3] : memref<4x18x18xf32, #tpu.memory_space<vmem>>, vector<4x1x18xf32>
    tpu.vector_store %arg3[%c0_2, %c17, %c0_3], %0 {strides = array<i32>} : memref<4x18x18xf32, #tpu.memory_space<vmem>>, vector<4x1x18xf32>,
    %cst_4 = arith.constant 0.000000e+00 : f32
    %3 = vector.broadcast %cst_4 : f32 to vector<4x18x1xf32>
    %c0_5 = arith.constant 0 : index
    %c0_6 = arith.constant 0 : index
    %c0_7 = arith.constant 0 : index
    %4 = vector.load %arg3[%c0_5, %c0_6, %c0_7] : memref<4x18x18xf32, #tpu.memory_space<vmem>>, vector<4x18x1xf32>
    tpu.vector_store %arg3[%c0_5, %c0_6, %c0_7], %3 {strides = array<i32>} : memref<4x18x18xf32, #tpu.memory_space<vmem>>, vector<4x18x1xf32>,
    %c0_8 = arith.constant 0 : index
    %c0_9 = arith.constant 0 : index
    %c17_10 = arith.constant 17 : index
    %5 = vector.load %arg3[%c0_8, %c0_9, %c17_10] : memref<4x18x18xf32, #tpu.memory_space<vmem>>, vector<4x18x1xf32>
    tpu.vector_store %arg3[%c0_8, %c0_9, %c17_10], %3 {strides = array<i32>} : memref<4x18x18xf32, #tpu.memory_space<vmem>>, vector<4x18x1xf32>,
    %c0_11 = arith.constant 0 : index
    %c0_12 = arith.constant 0 : index
    %c0_13 = arith.constant 0 : index
    %6 = vector.load %arg1[%c0_11, %c0_12, %c0_13] : memref<4x16x16xf32, #tpu.memory_space<vmem>>, vector<4x16x16xf32>
    %c0_14 = arith.constant 0 : index
    %c1 = arith.constant 1 : index
    %c1_15 = arith.constant 1 : index
    %7 = vector.load %arg3[%c0_14, %c1, %c1_15] : memref<4x18x18xf32, #tpu.memory_space<vmem>>, vector<4x16x16xf32>
    tpu.vector_store %arg3[%c0_14, %c1, %c1_15], %6 {strides = array<i32>} : memref<4x18x18xf32, #tpu.memory_space<vmem>>, vector<4x16x16xf32>,
    %c0_16 = arith.constant 0 : index
    %c0_17 = arith.constant 0 : index
    %c0_18 = arith.constant 0 : index
    %8 = vector.load %arg3[%c0_16, %c0_17, %c0_18] : memref<4x18x18xf32, #tpu.memory_space<vmem>>, vector<4x16x18xf32>
    %cst_19 = arith.constant 0.319167763 : f32
    %9 = vector.broadcast %cst_19 : f32 to vector<4x16x18xf32>
    %10 = arith.mulf %9, %8 : vector<4x16x18xf32>
    %c0_20 = arith.constant 0 : index
    %c1_21 = arith.constant 1 : index
    %c0_22 = arith.constant 0 : index
    %11 = vector.load %arg3[%c0_20, %c1_21, %c0_22] : memref<4x18x18xf32, #tpu.memory_space<vmem>>, vector<4x16x18xf32>
    %cst_23 = arith.constant 0.361664474 : f32
    %12 = vector.broadcast %cst_23 : f32 to vector<4x16x18xf32>
    %13 = arith.mulf %12, %11 : vector<4x16x18xf32>
    %14 = arith.addf %10, %13 : vector<4x16x18xf32>
    %c0_24 = arith.constant 0 : index
    %c2 = arith.constant 2 : index
    %c0_25 = arith.constant 0 : index
    %15 = vector.load %arg3[%c0_24, %c2, %c0_25] : memref<4x18x18xf32, #tpu.memory_space<vmem>>, vector<4x16x18xf32>
    %cst_26 = arith.constant 0.319167763 : f32
    %16 = vector.broadcast %cst_26 : f32 to vector<4x16x18xf32>
    %17 = arith.mulf %16, %15 : vector<4x16x18xf32>
    %18 = arith.addf %14, %17 : vector<4x16x18xf32>
    %19 = vector.extract_strided_slice %18 {offsets = [0, 0, 0], sizes = [4, 16, 16], strides = [1, 1, 1]} : vector<4x16x18xf32> to vector<4x16x16xf32>
    %cst_27 = arith.constant 0.319167763 : f32
    %20 = vector.broadcast %cst_27 : f32 to vector<4x16x16xf32>
    %21 = arith.mulf %20, %19 : vector<4x16x16xf32>
    %22 = vector.extract_strided_slice %18 {offsets = [0, 0, 1], sizes = [4, 16, 16], strides = [1, 1, 1]} : vector<4x16x18xf32> to vector<4x16x16xf32>
    %cst_28 = arith.constant 0.361664474 : f32
    %23 = vector.broadcast %cst_28 : f32 to vector<4x16x16xf32>
    %24 = arith.mulf %23, %22 : vector<4x16x16xf32>
    %25 = arith.addf %21, %24 : vector<4x16x16xf32>
    %26 = vector.extract_strided_slice %18 {offsets = [0, 0, 2], sizes = [4, 16, 16], strides = [1, 1, 1]} : vector<4x16x18xf32> to vector<4x16x16xf32>
    %cst_29 = arith.constant 0.319167763 : f32
    %27 = vector.broadcast %cst_29 : f32 to vector<4x16x16xf32>
    %28 = arith.mulf %27, %26 : vector<4x16x16xf32>
    %29 = arith.addf %25, %28 : vector<4x16x16xf32>
    %c0_30 = arith.constant 0 : index
    %c0_31 = arith.constant 0 : index
    %c0_32 = arith.constant 0 : index
    %30 = vector.load %arg2[%c0_30, %c0_31, %c0_32] : memref<4x16x16xf32, #tpu.memory_space<vmem>>, vector<4x16x16xf32>
    tpu.vector_store %arg2[%c0_30, %c0_31, %c0_32], %29 {strides = array<i32>} : memref<4x16x16xf32, #tpu.memory_space<vmem>>, vector<4x16x16xf32>,
    return
  }
  func.func @transform_0(%arg0: i32) -> (i32, i32, i32) {
    %c0_i32 = arith.constant 0 : i32
    %c0_i32_0 = arith.constant 0 : i32
    %c0_i32_1 = arith.constant 0 : i32
    return %arg0, %c0_i32, %c0_i32_0 : i32, i32, i32
  }
  func.func @transform_1(%arg0: i32) -> (i32, i32, i32) {
    %c0_i32 = arith.constant 0 : i32
    %c0_i32_0 = arith.constant 0 : i32
    %c0_i32_1 = arith.constant 0 : i32
    return %arg0, %c0_i32, %c0_i32_0 : i32, i32, i32
  }
}

</mosaic_0001>

<llo_original>
// kernel: gaussian_smoothing_2d.1
$region0: #{gaussian_smoothing_2d.1}
  #allocation0 [shape = 'u32[]', space=smem, size = 0x4, offset = 0x4, fixed_abs, tag = 'smem constant byte address 0x4 - core index']
  #allocation1 [shape = 'u32[144,128]{1,0:T(1,128)}', space=vmem, size = 0x12000, scoped, tag = 'internal scratch']
  #allocation2 [shape = 'f32[4,18,18]{2,1,0:T(8,128)}', space=vmem, size = 0xc000, scoped, tag = 'scratch operand']
  %s0 = inlined_call_operand.hbm [shape: f32[8,16,16], index: 0, kind: input, shape index: {}]
  %s1 = inlined_call_operand.hbm [shape: f32[8,16,16], index: 1, kind: output, shape index: {}]
  %s2 = sld [smem:[#allocation0]]
  $region41: #{gaussian_smoothing_2d.1} parent=0
    _
  %s4 = ssub.s32 1, %s2
  %s5 = scalar_select 0, %s4, %s2
  $region1: #{gaussian_smoothing_2d.1} parent=0
    #allocation3 [shape = 'u8[65536]{0}', space=vmem, size = 0x10000, scoped, tag = 'input window, operand 0']
    #allocation4 [shape = 's32[2]{0}', space=sflag, size = 0x8, scoped, tag = 'scoped memory for gaussian_smoothing_2d.1']
    #allocation5 [shape = 's32[2]{0}', space=sflag, size = 0x8, scoped, tag = 'scoped memory for gaussian_smoothing_2d.1']
    #allocation6 [shape = 'u8[65536]{0}', space=vmem, size = 0x10000, scoped, tag = 'output window, operand 0']
    %6 = vsyncpa [#allocation4], 0
    %s7 = scalar_lea.sflag [#allocation4], 1
    %8 = vsyncpa %s7, 0
    %9 = vsyncpa [#allocation5], 0
    %s10 = scalar_lea.sflag [#allocation5], 1
    %11 = vsyncpa %s10, 0
    loop: start=0, step=1, limit=4
    $region2: #{gaussian_smoothing_2d.1} parent=1 // loop_pre_header
      _
    $region3: #{gaussian_smoothing_2d.1} parent=1 // loop_header
      %s13 = sphi 0, %s17
      %p14 = scmp.ge.s32.totalorder %s13, 4
      %s23 = sphi 0, %s25
      %s26 = sphi 0, %s23
      %s27 = sphi 0, %s26
      %s43 = sphi 0, %s27
      %s49 = sphi 0, %s51
      %s52 = sphi 0, %s49
      %s53 = sphi 0, %s52
      %s69 = sphi 0, %s53
    $region4: #{gaussian_smoothing_2d.1} parent=1 // loop_header_branch
      %16 = sbr.rel (%p14) target = $region8
    $region5: #{gaussian_smoothing_2d.1} parent=1 // loop_body
      %s18 = ssub.s32 %s13, 1
      %s19 = ssub.s32 %s13, 2
      %s20 = sadd.s32 %s13, 1
      %s21 = ssub.s32 %s13, %s20
      %p22 = scmp.eq.s32.totalorder %s21, 0
      %s24 = sadd.s32 %s23, 1
      %s25 = scalar_select %p22, %s23, %s24
      %p28 = pneg %p22
      %p29 = scmp.eq.s32.totalorder %s13, 1
      %p30 = por %p28, %p29
      %p31 = scmp.ne.s32.totalorder %s23, %s26
      %p32 = scmp.eq.s32.totalorder %s13, 0
      %p33 = por %p31, %p32
      %p34 = scmp.ne.s32.totalorder %s23, %s26
      %p35 = scmp.eq.s32.totalorder %s18, 1
      %p36 = por %p34, %p35
      %p37 = scmp.ne.s32.totalorder %s26, %s27
      %p38 = scmp.eq.s32.totalorder %s18, 0
      %p39 = por %p37, %p38
      %p40 = scmp.ne.s32.totalorder %s26, %s27
      %p41 = scmp.eq.s32.totalorder %s19, 1
      %p42 = por %p40, %p41
      %p44 = scmp.ne.s32.totalorder %s27, %s43
      %p45 = scmp.eq.s32.totalorder %s19, 0
      %p46 = por %p44, %p45
      %s47 = ssub.s32 %s13, %s20
      %p48 = scmp.eq.s32.totalorder %s47, 0
      %s50 = sadd.s32 %s49, 1
      %s51 = scalar_select %p48, %s49, %s50
      %p54 = pneg %p48
      %p55 = scmp.eq.s32.totalorder %s13, 1
      %p56 = por %p54, %p55
      %p57 = scmp.ne.s32.totalorder %s49, %s52
      %p58 = scmp.eq.s32.totalorder %s13, 0
      %p59 = por %p57, %p58
      %p60 = scmp.ne.s32.totalorder %s49, %s52
      %p61 = scmp.eq.s32.totalorder %s18, 1
      %p62 = por %p60, %p61
      %p63 = scmp.ne.s32.totalorder %s52, %s53
      %p64 = scmp.eq.s32.totalorder %s18, 0
      %p65 = por %p63, %p64
      %p66 = scmp.ne.s32.totalorder %s52, %s53
      %p67 = scmp.eq.s32.totalorder %s19, 1
      %p68 = por %p66, %p67
      %p70 = scmp.ne.s32.totalorder %s53, %s69
      %p71 = scmp.eq.s32.totalorder %s19, 0
      %p72 = por %p70, %p71
      %p73 = scmp.le.s32.totalorder 1, %s13
      %p74 = scmp.lt.s32.totalorder %s13, 3
      %p75 = pnand %p73, %p74
      %p76 = pneg %p75
      // Predicated region
      $region9: #{gaussian_smoothing_2d.1} parent=5 // pred_check
        _
      $region10: #{gaussian_smoothing_2d.1} parent=5 // pred_check_branch
        %78 = sbr.rel (%p75) target = $region12
      $region11: #{gaussian_smoothing_2d.1} parent=5 // pred_region
        %s79 = ssub.s32 %s13, 1
      $region12: #{gaussian_smoothing_2d.1} parent=5 // pred_fallthru
        _
      %p80 = scmp.lt.s32.totalorder %s13, 2
      // Predicated region
      $region13: #{gaussian_smoothing_2d.1} parent=5 // pred_check
        %p81 = pneg %p80
      $region14: #{gaussian_smoothing_2d.1} parent=5 // pred_check_branch
        %83 = sbr.rel (%p81) target = $region16
      $region15: #{gaussian_smoothing_2d.1} parent=5 // pred_region
        // Predicated region
        $region17: #{gaussian_smoothing_2d.1} parent=15 // pred_check
          %p84 = pneg %p33
        $region18: #{gaussian_smoothing_2d.1} parent=15 // pred_check_branch
          %86 = sbr.rel (%p84) target = $region20
        $region19: #{gaussian_smoothing_2d.1} parent=15 // pred_region
          %s87 = sand.u32 %s23, 1
          %s88 = scalar_lea.sflag [#allocation4], %s87
          %s89 = sand.u32 %s23, 1
          %s90 = smul.addr %s89, 64
          %s91 = scalar_lea.vmem [#allocation3], %s90
          %s92 = smul.u32 4, %s13
          %s94 = ssub.s32 1024, 1024
          %95 = vsyncadd %s88, %s94
          %s96 = smul.addr %s92, 2
          %s97 = smul.addr %s96, 128
          %s98 = scalar_lea.hbm %s0, %s97
          %s99 = sshll.u32 %s91, 4
          %s100 = int_to_ptr.vmem [resolvable:$true] %s99
          %105 = dma.hbm_to_vmem [thread:$0]  %s98, 1024, %s100, %s88, 128, 128, 8
        $region20: #{gaussian_smoothing_2d.1} parent=15 // pred_fallthru
          _
      $region16: #{gaussian_smoothing_2d.1} parent=5 // pred_fallthru
        _
      %p106 = scmp.le.s32.totalorder 1, %s13
      %p107 = scmp.lt.s32.totalorder %s13, 3
      %p108 = pnand %p106, %p107
      %p109 = pneg %p108
      // Predicated region
      $region21: #{gaussian_smoothing_2d.1} parent=5 // pred_check
        _
      $region22: #{gaussian_smoothing_2d.1} parent=5 // pred_check_branch
        %111 = sbr.rel (%p108) target = $region24
      $region23: #{gaussian_smoothing_2d.1} parent=5 // pred_region
        %s112 = ssub.s32 %s13, 1
        %s113 = sand.u32 %s26, 1
        %s114 = scalar_lea.sflag [#allocation4], %s113
        %s115 = sand.u32 %s26, 1
        %s116 = smul.addr %s115, 64
        %s117 = scalar_lea.vmem [#allocation3], %s116
        // Predicated region
        $region25: #{gaussian_smoothing_2d.1} parent=23 // pred_check
          %p118 = pneg %p39
        $region26: #{gaussian_smoothing_2d.1} parent=23 // pred_check_branch
          %120 = sbr.rel (%p118) target = $region28
        $region27: #{gaussian_smoothing_2d.1} parent=23 // pred_region
          %121 = dma.done %s114, 1024
        $region28: #{gaussian_smoothing_2d.1} parent=23 // pred_fallthru
          _
        %s122 = sand.u32 %s26, 1
        %s123 = scalar_lea.sflag [#allocation4], %s122
        %s124 = sand.u32 %s26, 1
        %s125 = smul.addr %s124, 64
        %s126 = scalar_lea.vmem [#allocation3], %s125
        %p127 = pneg %p39
        %p128 = pneg %p36
        %p129 = pneg %p65
        %p130 = pneg %p62
        %s131 = sand.u32 %s52, 1
        %s132 = scalar_lea.sflag [#allocation5], %s131
        %s133 = sand.u32 %s52, 1
        %s134 = smul.addr %s133, 64
        %s135 = scalar_lea.vmem [#allocation6], %s134
        %s136 = smul.u32 4, %s18
        %s137 = smul.u32 4, %s18
        %vm138 = vcmask 139264
        %139 = vst.msk [vmem:[#allocation2] sm:$0x1] %vm138, 0.0
        %140 = vst.msk [vmem:[#allocation2 + $0x18] sm:$0x1] %vm138, 0.0
        %141 = vst.msk [vmem:[#allocation2 + $0x30] sm:$0x1] %vm138, 0.0
        %142 = vst.msk [vmem:[#allocation2 + $0x48] sm:$0x1] %vm138, 0.0
        %143 = vst.msk [vmem:[#allocation2 + $0x11] sm:$0x1] %vm138, 0.0
        %144 = vst.msk [vmem:[#allocation2 + $0x29] sm:$0x1] %vm138, 0.0
        %145 = vst.msk [vmem:[#allocation2 + $0x41] sm:$0x1] %vm138, 0.0
        %146 = vst.msk [vmem:[#allocation2 + $0x59] sm:$0x1] %vm138, 0.0
        %vm147 = vcmask 7168
        %148 = vst.msk [vmem:[#allocation2] sm:$0xff] %vm147, 0.0
        %149 = vst.msk [vmem:[#allocation2 + $0x8] sm:$0xff] %vm147, 0.0
        %vm150 = vcmask 1024
        %151 = vst.msk [vmem:[#allocation2 + $0x10] sm:$0x3] %vm150, 0.0
        %152 = vst.msk [vmem:[#allocation2 + $0x18] sm:$0xff] %vm147, 0.0
        %153 = vst.msk [vmem:[#allocation2 + $0x20] sm:$0xff] %vm147, 0.0
        %154 = vst.msk [vmem:[#allocation2 + $0x28] sm:$0x3] %vm150, 0.0
        %155 = vst.msk [vmem:[#allocation2 + $0x30] sm:$0xff] %vm147, 0.0
        %156 = vst.msk [vmem:[#allocation2 + $0x38] sm:$0xff] %vm147, 0.0
        %157 = vst.msk [vmem:[#allocation2 + $0x40] sm:$0x3] %vm150, 0.0
        %158 = vst.msk [vmem:[#allocation2 + $0x48] sm:$0xff] %vm147, 0.0
        %159 = vst.msk [vmem:[#allocation2 + $0x50] sm:$0xff] %vm147, 0.0
        %160 = vst.msk [vmem:[#allocation2 + $0x58] sm:$0x3] %vm150, 0.0
        %vm161 = vcmask 146568
        %162 = vst.msk [vmem:[#allocation2] sm:$0xff] %vm161, 0.0
        %163 = vst.msk [vmem:[#allocation2 + $0x8] sm:$0xff] %vm161, 0.0
        %vm164 = vcmask 140424
        %165 = vst.msk [vmem:[#allocation2 + $0x10] sm:$0x3] %vm164, 0.0
        %166 = vst.msk [vmem:[#allocation2 + $0x18] sm:$0xff] %vm161, 0.0
        %167 = vst.msk [vmem:[#allocation2 + $0x20] sm:$0xff] %vm161, 0.0
        %168 = vst.msk [vmem:[#allocation2 + $0x28] sm:$0x3] %vm164, 0.0
        %169 = vst.msk [vmem:[#allocation2 + $0x30] sm:$0xff] %vm161, 0.0
        %170 = vst.msk [vmem:[#allocation2 + $0x38] sm:$0xff] %vm161, 0.0
        %171 = vst.msk [vmem:[#allocation2 + $0x40] sm:$0x3] %vm164, 0.0
        %172 = vst.msk [vmem:[#allocation2 + $0x48] sm:$0xff] %vm161, 0.0
        %173 = vst.msk [vmem:[#allocation2 + $0x50] sm:$0xff] %vm161, 0.0
        %174 = vst.msk [vmem:[#allocation2 + $0x58] sm:$0x3] %vm164, 0.0
        %v175 = vld [vmem:[%s117] sm:$0xff]
        %v176 = vld [vmem:[%s117 + $0x8] sm:$0xff]
        %v177 = vld [vmem:[%s117 + $0x10] sm:$0xff]
        %v178 = vld [vmem:[%s117 + $0x18] sm:$0xff]
        %v179 = vld [vmem:[%s117 + $0x20] sm:$0xff]
        %v180 = vld [vmem:[%s117 + $0x28] sm:$0xff]
        %v181 = vld [vmem:[%s117 + $0x30] sm:$0xff]
        %v182 = vld [vmem:[%s117 + $0x38] sm:$0xff]
        %191 = vrot.lane.b32.xlu0 %v175, 1
        %v192 = vpop.permute.xlu0 %191
        %193 = vrot.lane.b32.xlu0 %v176, 1
        %v194 = vpop.permute.xlu0 %193
        %195 = vrot.lane.b32.xlu0 %v177, 1
        %v196 = vpop.permute.xlu0 %195
        %197 = vrot.lane.b32.xlu0 %v178, 1
        %v198 = vpop.permute.xlu0 %197
        %199 = vrot.lane.b32.xlu0 %v179, 1
        %v200 = vpop.permute.xlu0 %199
        %201 = vrot.lane.b32.xlu0 %v180, 1
        %v202 = vpop.permute.xlu0 %201
        %203 = vrot.lane.b32.xlu0 %v181, 1
        %v204 = vpop.permute.xlu0 %203
        %205 = vrot.lane.b32.xlu0 %v182, 1
        %v206 = vpop.permute.xlu0 %205
        %vm215 = vcmask 138248
        %216 = vst.msk [vmem:[#allocation2 + $0x1] sm:$0xff] %vm215, %v192
        %217 = vst.msk [vmem:[#allocation2 + $0x9] sm:$0xff] %vm215, %v194
        %218 = vst.msk [vmem:[#allocation2 + $0x19] sm:$0xff] %vm215, %v196
        %219 = vst.msk [vmem:[#allocation2 + $0x21] sm:$0xff] %vm215, %v198
        %220 = vst.msk [vmem:[#allocation2 + $0x31] sm:$0xff] %vm215, %v200
        %221 = vst.msk [vmem:[#allocation2 + $0x39] sm:$0xff] %vm215, %v202
        %222 = vst.msk [vmem:[#allocation2 + $0x49] sm:$0xff] %vm215, %v204
        %223 = vst.msk [vmem:[#allocation2 + $0x51] sm:$0xff] %vm215, %v206
        %v224 = vld [vmem:[#allocation2] sm:$0xff]
        %v225 = vld [vmem:[#allocation2 + $0x8] sm:$0xff]
        %v226 = vld [vmem:[#allocation2 + $0x18] sm:$0xff]
        %v227 = vld [vmem:[#allocation2 + $0x20] sm:$0xff]
        %v228 = vld [vmem:[#allocation2 + $0x30] sm:$0xff]
        %v229 = vld [vmem:[#allocation2 + $0x38] sm:$0xff]
        %v230 = vld [vmem:[#allocation2 + $0x48] sm:$0xff]
        %v231 = vld [vmem:[#allocation2 + $0x50] sm:$0xff]
        %v232 = vmul.f32 %v224, 0.31916776
        %v233 = vmul.f32 %v225, 0.31916776
        %v234 = vmul.f32 %v226, 0.31916776
        %v235 = vmul.f32 %v227, 0.31916776
        %v236 = vmul.f32 %v228, 0.31916776
        %v237 = vmul.f32 %v229, 0.31916776
        %v238 = vmul.f32 %v230, 0.31916776
        %v239 = vmul.f32 %v231, 0.31916776
        %v240 = vld [vmem:[#allocation2 + $0x1] sm:$0xff]
        %v241 = vld [vmem:[#allocation2 + $0x9] sm:$0xff]
        %v242 = vld [vmem:[#allocation2 + $0x19] sm:$0xff]
        %v243 = vld [vmem:[#allocation2 + $0x21] sm:$0xff]
        %v244 = vld [vmem:[#allocation2 + $0x31] sm:$0xff]
        %v245 = vld [vmem:[#allocation2 + $0x39] sm:$0xff]
        %v246 = vld [vmem:[#allocation2 + $0x49] sm:$0xff]
        %v247 = vld [vmem:[#allocation2 + $0x51] sm:$0xff]
        %v248 = vmul.f32 %v240, 0.36166447
        %v249 = vmul.f32 %v241, 0.36166447
        %v250 = vmul.f32 %v242, 0.36166447
        %v251 = vmul.f32 %v243, 0.36166447
        %v252 = vmul.f32 %v244, 0.36166447
        %v253 = vmul.f32 %v245, 0.36166447
        %v254 = vmul.f32 %v246, 0.36166447
        %v255 = vmul.f32 %v247, 0.36166447
        %v256 = vadd.f32 %v232, %v248
        %v257 = vadd.f32 %v233, %v249
        %v258 = vadd.f32 %v234, %v250
        %v259 = vadd.f32 %v235, %v251
        %v260 = vadd.f32 %v236, %v252
        %v261 = vadd.f32 %v237, %v253
        %v262 = vadd.f32 %v238, %v254
        %v263 = vadd.f32 %v239, %v255
        %v264 = vld [vmem:[#allocation2 + $0x2] sm:$0xff]
        %v265 = vld [vmem:[#allocation2 + $0xa] sm:$0xff]
        %v266 = vld [vmem:[#allocation2 + $0x1a] sm:$0xff]
        %v267 = vld [vmem:[#allocation2 + $0x22] sm:$0xff]
        %v268 = vld [vmem:[#allocation2 + $0x32] sm:$0xff]
        %v269 = vld [vmem:[#allocation2 + $0x3a] sm:$0xff]
        %v270 = vld [vmem:[#allocation2 + $0x4a] sm:$0xff]
        %v271 = vld [vmem:[#allocation2 + $0x52] sm:$0xff]
        %v272 = vmul.f32 %v264, 0.31916776
        %v273 = vmul.f32 %v265, 0.31916776
        %v274 = vmul.f32 %v266, 0.31916776
        %v275 = vmul.f32 %v267, 0.31916776
        %v276 = vmul.f32 %v268, 0.31916776
        %v277 = vmul.f32 %v269, 0.31916776
        %v278 = vmul.f32 %v270, 0.31916776
        %v279 = vmul.f32 %v271, 0.31916776
        %v280 = vadd.f32 %v256, %v272
        %v281 = vadd.f32 %v257, %v273
        %v282 = vadd.f32 %v258, %v274
        %v283 = vadd.f32 %v259, %v275
        %v284 = vadd.f32 %v260, %v276
        %v285 = vadd.f32 %v261, %v277
        %v286 = vadd.f32 %v262, %v278
        %v287 = vadd.f32 %v263, %v279
        %v288 = vmul.f32 %v280, 0.31916776
        %v289 = vmul.f32 %v281, 0.31916776
        %v290 = vmul.f32 %v282, 0.31916776
        %v291 = vmul.f32 %v283, 0.31916776
        %v292 = vmul.f32 %v284, 0.31916776
        %v293 = vmul.f32 %v285, 0.31916776
        %v294 = vmul.f32 %v286, 0.31916776
        %v295 = vmul.f32 %v287, 0.31916776
        %v296 = vmul.f32 %v280, 0.36166447
        %v297 = vmul.f32 %v281, 0.36166447
        %v298 = vmul.f32 %v282, 0.36166447
        %v299 = vmul.f32 %v283, 0.36166447
        %v300 = vmul.f32 %v284, 0.36166447
        %v301 = vmul.f32 %v285, 0.36166447
        %v302 = vmul.f32 %v286, 0.36166447
        %v303 = vmul.f32 %v287, 0.36166447
        %312 = vrot.lane.b32.xlu0 %v296, 127
        %v313 = vpop.permute.xlu0 %312
        %314 = vrot.lane.b32.xlu0 %v297, 127
        %v315 = vpop.permute.xlu0 %314
        %316 = vrot.lane.b32.xlu0 %v298, 127
        %v317 = vpop.permute.xlu0 %316
        %318 = vrot.lane.b32.xlu0 %v299, 127
        %v319 = vpop.permute.xlu0 %318
        %320 = vrot.lane.b32.xlu0 %v300, 127
        %v321 = vpop.permute.xlu0 %320
        %322 = vrot.lane.b32.xlu0 %v301, 127
        %v323 = vpop.permute.xlu0 %322
        %324 = vrot.lane.b32.xlu0 %v302, 127
        %v325 = vpop.permute.xlu0 %324
        %326 = vrot.lane.b32.xlu0 %v303, 127
        %v327 = vpop.permute.xlu0 %326
        %v336 = vadd.f32 %v288, %v313
        %v337 = vadd.f32 %v289, %v315
        %v338 = vadd.f32 %v290, %v317
        %v339 = vadd.f32 %v291, %v319
        %v340 = vadd.f32 %v292, %v321
        %v341 = vadd.f32 %v293, %v323
        %v342 = vadd.f32 %v294, %v325
        %v343 = vadd.f32 %v295, %v327
        %352 = vrot.lane.b32.xlu0 %v288, 126
        %v353 = vpop.permute.xlu0 %352
        %354 = vrot.lane.b32.xlu0 %v289, 126
        %v355 = vpop.permute.xlu0 %354
        %356 = vrot.lane.b32.xlu0 %v290, 126
        %v357 = vpop.permute.xlu0 %356
        %358 = vrot.lane.b32.xlu0 %v291, 126
        %v359 = vpop.permute.xlu0 %358
        %360 = vrot.lane.b32.xlu0 %v292, 126
        %v361 = vpop.permute.xlu0 %360
        %362 = vrot.lane.b32.xlu0 %v293, 126
        %v363 = vpop.permute.xlu0 %362
        %364 = vrot.lane.b32.xlu0 %v294, 126
        %v365 = vpop.permute.xlu0 %364
        %366 = vrot.lane.b32.xlu0 %v295, 126
        %v367 = vpop.permute.xlu0 %366
        %v376 = vadd.f32 %v336, %v353
        %v377 = vadd.f32 %v337, %v355
        %v378 = vadd.f32 %v338, %v357
        %v379 = vadd.f32 %v339, %v359
        %v380 = vadd.f32 %v340, %v361
        %v381 = vadd.f32 %v341, %v363
        %v382 = vadd.f32 %v342, %v365
        %v383 = vadd.f32 %v343, %v367
        %vm384 = vcmask 130048
        %385 = vst.msk [vmem:[%s135] sm:$0xff] %vm384, %v376
        %386 = vst.msk [vmem:[%s135 + $0x8] sm:$0xff] %vm384, %v377
        %387 = vst.msk [vmem:[%s135 + $0x10] sm:$0xff] %vm384, %v378
        %388 = vst.msk [vmem:[%s135 + $0x18] sm:$0xff] %vm384, %v379
        %389 = vst.msk [vmem:[%s135 + $0x20] sm:$0xff] %vm384, %v380
        %390 = vst.msk [vmem:[%s135 + $0x28] sm:$0xff] %vm384, %v381
        %391 = vst.msk [vmem:[%s135 + $0x30] sm:$0xff] %vm384, %v382
        %392 = vst.msk [vmem:[%s135 + $0x38] sm:$0xff] %vm384, %v383
        %s393 = sand.u32 %s52, 1
        %s394 = scalar_lea.sflag [#allocation5], %s393
        %s395 = sand.u32 %s52, 1
        %s396 = smul.addr %s395, 64
        %s397 = scalar_lea.vmem [#allocation6], %s396
        // Predicated region
        $region29: #{gaussian_smoothing_2d.1} parent=23 // pred_check
          %p398 = pneg %p62
        $region30: #{gaussian_smoothing_2d.1} parent=23 // pred_check_branch
          %400 = sbr.rel (%p398) target = $region32
        $region31: #{gaussian_smoothing_2d.1} parent=23 // pred_region
          %s401 = smul.u32 4, %s18
          %s403 = ssub.s32 1024, 1024
          %404 = vsyncadd %s394, %s403
          %s405 = smul.addr %s401, 2
          %s406 = smul.addr %s405, 128
          %s407 = scalar_lea.hbm %s1, %s406
          %s408 = sshll.u32 %s397, 4
          %s409 = int_to_ptr.vmem [resolvable:$true] %s408
          %414 = dma.vmem_to_hbm [thread:$0]  %s409, 1024, %s407, %s394, 128, 128, 8
        $region32: #{gaussian_smoothing_2d.1} parent=23 // pred_fallthru
          _
      $region24: #{gaussian_smoothing_2d.1} parent=5 // pred_fallthru
        _
      %p415 = scmp.le.s32.totalorder 2, %s13
      // Predicated region
      $region33: #{gaussian_smoothing_2d.1} parent=5 // pred_check
        %p416 = pneg %p415
      $region34: #{gaussian_smoothing_2d.1} parent=5 // pred_check_branch
        %418 = sbr.rel (%p416) target = $region36
      $region35: #{gaussian_smoothing_2d.1} parent=5 // pred_region
        %s419 = ssub.s32 %s13, 2
        // Predicated region
        $region37: #{gaussian_smoothing_2d.1} parent=35 // pred_check
          %p420 = pneg %p68
        $region38: #{gaussian_smoothing_2d.1} parent=35 // pred_check_branch
          %422 = sbr.rel (%p420) target = $region40
        $region39: #{gaussian_smoothing_2d.1} parent=35 // pred_region
          %s423 = sand.u32 %s53, 1
          %s424 = scalar_lea.sflag [#allocation5], %s423
          %s425 = sand.u32 %s53, 1
          %s426 = smul.addr %s425, 64
          %s427 = scalar_lea.vmem [#allocation6], %s426
          %428 = dma.done %s424, 1024
        $region40: #{gaussian_smoothing_2d.1} parent=35 // pred_fallthru
          _
      $region36: #{gaussian_smoothing_2d.1} parent=5 // pred_fallthru
        _
    $region6: #{gaussian_smoothing_2d.1} parent=1 // loop_footer
      %s17 = sadd.s32 1, %s13
    $region7: #{gaussian_smoothing_2d.1} parent=1 // loop_footer_branch
      %12 = sbr.rel target = $region3
    $region8: #{gaussian_smoothing_2d.1} parent=1 // loop_exit
      _
    %429 = vsyncpa [#allocation4], 1
    %s430 = scalar_lea.sflag [#allocation4], 1
    %431 = vsyncpa %s430, 1
    %432 = vsyncpa [#allocation5], 1
    %s433 = scalar_lea.sflag [#allocation5], 1
    %434 = vsyncpa %s433, 1

</llo_original>
